<compile_context>
chip_gen: v7x
topology: tpu7x:2x2x1
jax: 0.10.0
libtpu: 0.0.40
codegen_flags: <defaults>
</compile_context>

<pallas_src>
import math
import jax
import jax.numpy as jnp
from jax.experimental import pallas as pl
from jax.experimental.pallas import tpu as pltpu


def _round_up(a, b):
    return ((a + b - 1) // b) * b


def _attn_kernel_c1(x_ref, w1_ref, b1_ref, w2r_ref, b2_ref, a_ref):
    # Linear (bf16 MXU, f32 acc) -> Tanh (f32) -> dot with the single attention
    # vector via VPU multiply + lane reduce (MXU stays free, no 1-lane MXU pop).
    h = jnp.dot(x_ref[...], w1_ref[...], preferred_element_type=jnp.float32)
    h = jnp.tanh(h + b1_ref[...].astype(jnp.float32))                  # (tm, D) f32
    a = jnp.sum(h * w2r_ref[...].astype(jnp.float32), axis=-1, keepdims=True)
    a_ref[...] = (a + b2_ref[...].astype(jnp.float32)).astype(a_ref.dtype)


def _attn_kernel_mxu(x_ref, w1_ref, b1_ref, w2_ref, b2_ref, a_ref):
    # General n_classes path: both projections on the MXU, f32 accumulation.
    h = jnp.dot(x_ref[...], w1_ref[...], preferred_element_type=jnp.float32)
    h = jnp.tanh(h + b1_ref[...].astype(jnp.float32))                  # (tm, D) f32
    a = jnp.dot(h.astype(w2_ref.dtype), w2_ref[...],
                preferred_element_type=jnp.float32)                    # (tm, C) f32
    a_ref[...] = (a + b2_ref[...].astype(jnp.float32)).astype(a_ref.dtype)


def attn_net_forward(x, w1, b1, w2, b2, *, tm=1024, compute_dtype=jnp.bfloat16):
    """x: [N, L]; w1: [L, D]; b1: [1, D]; w2: [D, C]; b2: [1, C] -> (A [N, C], x)."""
    N, L = x.shape
    D = w1.shape[1]
    C = w2.shape[1]
    out_dtype = x.dtype
    cdt = compute_dtype if compute_dtype is not None else x.dtype

    # Matmul operands in the compute dtype (bf16 by default); biases stay f32.
    x_c = x if x.dtype == cdt else x.astype(cdt)
    w1_c = w1 if w1.dtype == cdt else w1.astype(cdt)
    b1_c = b1.astype(jnp.float32)
    b2_c = b2.astype(jnp.float32)

    # Row-tile selection (no padding of x; last block may be ragged):
    #  * big bags:   tm-row tiles
    #  * mid bags:   >= 2 balanced 128-aligned tiles (keeps both v7x TCs busy)
    #  * tiny bags:  a single 8-aligned tile
    if N > tm:
        tm_eff = tm
    elif N >= 256:
        tm_eff = _round_up(pl.cdiv(N, 2), 128)
    else:
        tm_eff = max(8, _round_up(N, 8))
    num_tiles = pl.cdiv(N, tm_eff)

    if C == 1:
        kernel = _attn_kernel_c1
        # (D, 1) -> (1, D) once, outside the kernel; kept f32 (tiny, VPU path).
        w2_arg = w2.reshape(1, D).astype(jnp.float32)
        w2_spec = pl.BlockSpec((1, D), lambda i: (0, 0))
    else:
        kernel = _attn_kernel_mxu
        w2_arg = w2 if w2.dtype == cdt else w2.astype(cdt)
        w2_spec = pl.BlockSpec((D, C), lambda i: (0, 0))

    a = pl.pallas_call(
        kernel,
        out_shape=jax.ShapeDtypeStruct((N, C), out_dtype),
        grid_spec=pltpu.PrefetchScalarGridSpec(
            num_scalar_prefetch=0,
            grid=(num_tiles,),
            in_specs=[
                pl.BlockSpec((tm_eff, L), lambda i: (i, 0)),   # x row tile (pipelined)
                pl.BlockSpec((L, D), lambda i: (0, 0)),        # W1 (VMEM-resident)
                pl.BlockSpec((1, D), lambda i: (0, 0)),        # b1
                w2_spec,                                       # W2 (or its (1, D) row)
                pl.BlockSpec((1, C), lambda i: (0, 0)),        # b2
            ],
            out_specs=pl.BlockSpec((tm_eff, C), lambda i: (i, 0)),
        ),
        compiler_params=pltpu.CompilerParams(
            dimension_semantics=("parallel",)),
    )(x_c, w1_c, b1_c, w2_arg, b2_c)

    # Module returns (attention scores, untouched input features).
    return a, x


def init_params(key, L, D, n_classes, dtype=jnp.float32):
    """Deterministic init mimicking nn.Linear's uniform(-1/sqrt(fan_in), +1/sqrt(fan_in))."""
    k1, k2, k3, k4 = jax.random.split(key, 4)
    lim1 = 1.0 / math.sqrt(L)
    lim2 = 1.0 / math.sqrt(D)
    w1 = jax.random.uniform(k1, (L, D), dtype, -lim1, lim1)
    b1 = jax.random.uniform(k2, (1, D), dtype, -lim1, lim1)
    w2 = jax.random.uniform(k3, (D, n_classes), dtype, -lim2, lim2)
    b2 = jax.random.uniform(k4, (1, n_classes), dtype, -lim2, lim2)
    return w1, b1, w2, b2


if __name__ == "__main__":
    # Module defaults: L=1024, D=256, dropout=False (no dropout op in forward).
    # TODO(synk): nn.Dropout(0.25) branch (dropout=True) is not implemented.
    L, D = 1024, 256
    key = jax.random.PRNGKey(0)
    kx1, kx2, kp1, kp2 = jax.random.split(key, 4)

    def ref_fwd(x, w1, b1, w2, b2):
        # Reference with the same bf16 operand rounding / f32 accumulation as
        # the kernel (tolerance kept loose-ish for accumulation-order effects).
        xb = x.astype(jnp.bfloat16)
        w1b = w1.astype(jnp.bfloat16)
        h = jnp.tanh(jnp.dot(xb, w1b, preferred_element_type=jnp.float32)
                     + b1.astype(jnp.float32))
        if w2.shape[1] == 1:
            a = jnp.sum(h * w2.reshape(1, -1), axis=-1, keepdims=True)
        else:
            a = jnp.dot(h.astype(jnp.bfloat16), w2.astype(jnp.bfloat16),
                        preferred_element_type=jnp.float32)
        return a + b2.astype(jnp.float32)

    ok = True

    # Case 1: tiny bag, default n_classes=1 -> single-step VPU-reduce path.
    w1, b1, w2, b2 = init_params(kp1, L, D, 1)
    x1 = jax.random.normal(kx1, (16, L), dtype=jnp.float32)
    a1, x1_out = attn_net_forward(x1, w1, b1, w2, b2)
    a1 = jax.block_until_ready(a1)
    x1_out = jax.block_until_ready(x1_out)
    ok &= a1.shape == (16, 1) and a1.dtype == x1.dtype
    ok &= bool(jnp.allclose(a1, ref_fwd(x1, w1, b1, w2, b2), atol=5e-3, rtol=5e-3))
    ok &= bool(jnp.array_equal(x1_out, x1))

    # Case 2: ragged bag (N=300, not a tile multiple) exercising the no-pad
    # multi-step path, plus n_classes=3 exercising the general MXU path.
    w1m, b1m, w2m, b2m = init_params(kp2, L, D, 3)
    x2 = jax.random.normal(kx2, (300, L), dtype=jnp.float32)
    a2, x2_out = attn_net_forward(x2, w1m, b1m, w2m, b2m)
    a2 = jax.block_until_ready(a2)
    x2_out = jax.block_until_ready(x2_out)
    ok &= a2.shape == (300, 3) and a2.dtype == x2.dtype
    ok &= bool(jnp.allclose(a2, ref_fwd(x2, w1m, b1m, w2m, b2m), atol=5e-3, rtol=5e-3))
    ok &= bool(jnp.array_equal(x2_out, x2))

    assert ok
    print("KERNEL_OK")
</pallas_src>

<mosaic_0001>
module attributes {stable_mosaic.version = 11 : i64} {
  func.func @_attn_kernel_c1(%arg0: i32, %arg1: memref<16x1024xbf16, #tpu.memory_space<vmem>>, %arg2: memref<1024x256xbf16, #tpu.memory_space<vmem>>, %arg3: memref<1x256xf32, #tpu.memory_space<vmem>>, %arg4: memref<1x256xf32, #tpu.memory_space<vmem>>, %arg5: memref<1x1xf32, #tpu.memory_space<vmem>>, %arg6: memref<16x1xf32, #tpu.memory_space<vmem>>) attributes {dimension_semantics = [#tpu.dimension_semantics<parallel>], iteration_bounds = array<i64: 1>, scalar_prefetch = 0 : i64, scratch_operands = 0 : i64, tpu.core_type = #tpu.core_type<tc>, window_params = [{transform_indices = @transform_0, window_bounds = array<i64: 16, 1024>}, {pipeline_mode = #tpu.pipeline_mode<synchronous>, transform_indices = @transform_1, window_bounds = array<i64: 1024, 256>}, {pipeline_mode = #tpu.pipeline_mode<synchronous>, transform_indices = @transform_2, window_bounds = array<i64: 1, 256>}, {pipeline_mode = #tpu.pipeline_mode<synchronous>, transform_indices = @transform_3, window_bounds = array<i64: 1, 256>}, {pipeline_mode = #tpu.pipeline_mode<synchronous>, transform_indices = @transform_4, window_bounds = array<i64: 1, 1>}, {transform_indices = @transform_5, window_bounds = array<i64: 16, 1>}]} {
    %c0 = arith.constant 0 : index
    %c0_0 = arith.constant 0 : index
    %0 = vector.load %arg1[%c0, %c0_0] : memref<16x1024xbf16, #tpu.memory_space<vmem>>, vector<16x1024xbf16>
    %c0_1 = arith.constant 0 : index
    %c0_2 = arith.constant 0 : index
    %1 = vector.load %arg2[%c0_1, %c0_2] : memref<1024x256xbf16, #tpu.memory_space<vmem>>, vector<1024x256xbf16>
    %cst = arith.constant dense<0.000000e+00> : vector<16x256xf32>
    %2 = tpu.matmul %0, %1, %cst {dimension_numbers = #tpu.dot_dimension_numbers<[1], [0], [0], [1], [0, 0, 1, 1], [], []>} : vector<16x1024xbf16>, vector<1024x256xbf16>, vector<16x256xf32> -> vector<16x256xf32>
    %c0_3 = arith.constant 0 : index
    %c0_4 = arith.constant 0 : index
    %3 = vector.load %arg3[%c0_3, %c0_4] : memref<1x256xf32, #tpu.memory_space<vmem>>, vector<1x256xf32>
    %4 = vector.broadcast %3 : vector<1x256xf32> to vector<16x256xf32>
    %5 = arith.addf %2, %4 : vector<16x256xf32>
    %6 = math.tanh %5 : vector<16x256xf32>
    %c0_5 = arith.constant 0 : index
    %c0_6 = arith.constant 0 : index
    %7 = vector.load %arg4[%c0_5, %c0_6] : memref<1x256xf32, #tpu.memory_space<vmem>>, vector<1x256xf32>
    %8 = vector.broadcast %7 : vector<1x256xf32> to vector<16x256xf32>
    %9 = arith.mulf %6, %8 : vector<16x256xf32>
    %cst_7 = arith.constant dense<0.000000e+00> : vector<16xf32>
    %10 = vector.multi_reduction <add>, %9, %cst_7 [1] : vector<16x256xf32> to vector<16xf32>
    %11 = vector.shape_cast %10 : vector<16xf32> to vector<16x1xf32>
    %c0_8 = arith.constant 0 : index
    %c0_9 = arith.constant 0 : index
    %12 = vector.load %arg5[%c0_8, %c0_9] : memref<1x1xf32, #tpu.memory_space<vmem>>, vector<1x1xf32>
    %13 = vector.broadcast %12 : vector<1x1xf32> to vector<16x1xf32>
    %14 = arith.addf %11, %13 : vector<16x1xf32>
    %c0_10 = arith.constant 0 : index
    %c0_11 = arith.constant 0 : index
    %15 = vector.load %arg6[%c0_10, %c0_11] : memref<16x1xf32, #tpu.memory_space<vmem>>, vector<16x1xf32>
    tpu.vector_store %arg6[%c0_10, %c0_11], %14 {strides = array<i32>} : memref<16x1xf32, #tpu.memory_space<vmem>>, vector<16x1xf32>,
    return
  }
  func.func @transform_0(%arg0: i32) -> (i32, i32) {
    %c0_i32 = arith.constant 0 : i32
    %c0_i32_0 = arith.constant 0 : i32
    return %arg0, %c0_i32 : i32, i32
  }
  func.func @transform_1(%arg0: i32) -> (i32, i32) {
    %c0_i32 = arith.constant 0 : i32
    %c0_i32_0 = arith.constant 0 : i32
    %c0_i32_1 = arith.constant 0 : i32
    return %c0_i32, %c0_i32_0 : i32, i32
  }
  func.func @transform_2(%arg0: i32) -> (i32, i32) {
    %c0_i32 = arith.constant 0 : i32
    %c0_i32_0 = arith.constant 0 : i32
    %c0_i32_1 = arith.constant 0 : i32
    return %c0_i32, %c0_i32_0 : i32, i32
  }
  func.func @transform_3(%arg0: i32) -> (i32, i32) {
    %c0_i32 = arith.constant 0 : i32
    %c0_i32_0 = arith.constant 0 : i32
    %c0_i32_1 = arith.constant 0 : i32
    return %c0_i32, %c0_i32_0 : i32, i32
  }
  func.func @transform_4(%arg0: i32) -> (i32, i32) {
    %c0_i32 = arith.constant 0 : i32
    %c0_i32_0 = arith.constant 0 : i32
    %c0_i32_1 = arith.constant 0 : i32
    return %c0_i32, %c0_i32_0 : i32, i32
  }
  func.func @transform_5(%arg0: i32) -> (i32, i32) {
    %c0_i32 = arith.constant 0 : i32
    %c0_i32_0 = arith.constant 0 : i32
    return %arg0, %c0_i32 : i32, i32
  }
}

</mosaic_0001>

<llo_original>
// kernel: tpu_custom_call.1
$region0: #{tpu_custom_call.1}
  #allocation0 [shape = 'u32[]', space=smem, size = 0x4, offset = 0x4, fixed_abs, tag = 'smem constant byte address 0x4 - core index']
  #allocation1 [shape = 'u32[144,128]{1,0:T(1,128)}', space=vmem, size = 0x12000, scoped, tag = 'internal scratch']
  #allocation2 [shape = 'f32[1,1]{1,0:T(1,128)S(1)}', space=vmem, size = 0x200, scoped, tag = 'scoped memory for tpu_custom_call.1']
  %s0 = inlined_call_operand.hbm [shape: bf16[16,1024], index: 0, kind: input, shape index: {}]
  %s1 = inlined_call_operand.hbm [shape: bf16[1024,256], index: 1, kind: input, shape index: {}]
  %s2 = inlined_call_operand.vmem [shape: f32[1,256], index: 2, kind: input, shape index: {}]
  %s3 = inlined_call_operand.vmem [shape: f32[1,256], index: 3, kind: input, shape index: {}]
  %s4 = inlined_call_operand.<no memory space> [shape: f32[1,1], index: 4, kind: input, shape index: {}]
  %s5 = inlined_call_operand.vmem [shape: f32[16,1], index: 5, kind: output, shape index: {}]
  %s6 = sld [smem:[#allocation0]]
  $region38: #{tpu_custom_call.1} parent=0
    _
  %s8 = ssub.s32 1, %s6
  %s9 = scalar_select 0, %s8, %s6
  %v10 = vstv %s4
  %11 = vst [vmem:[#allocation2] sm:$0x1] %v10
  $region1: #{tpu_custom_call.1} parent=0
    #allocation3 [shape = 'u8[32768]{0}', space=vmem, size = 0x8000, scoped, tag = 'input window, operand 0, single buffered']
    #allocation4 [shape = 's32[1]{0}', space=sflag, size = 0x4, scoped, tag = 'scoped memory for tpu_custom_call.1']
    #allocation5 [shape = 'u8[524288]{0}', space=vmem, size = 0x80000, scoped, tag = 'input window, operand 1, single buffered']
    #allocation6 [shape = 's32[1]{0}', space=sflag, size = 0x4, scoped, tag = 'scoped memory for tpu_custom_call.1']
    %12 = vsyncpa [#allocation4], 0
    %13 = vsyncpa [#allocation6], 0
    // Predicated region
    $region2: #{tpu_custom_call.1} parent=1 // pred_check
      _
    $region3: #{tpu_custom_call.1} parent=1 // pred_check_branch
      %15 = sbr.rel (0) target = $region5
    $region4: #{tpu_custom_call.1} parent=1 // pred_region
      %s17 = ssub.s32 1024, 1024
      %18 = vsyncadd [#allocation4], %s17
      %s19 = sshll.u32 [#allocation3], 4
      %s20 = int_to_ptr.vmem [resolvable:$true] %s19
      %25 = dma.hbm_to_vmem [thread:$0]  %s0, 1024, %s20, [#allocation4], 512, 512, 32
    $region5: #{tpu_custom_call.1} parent=1 // pred_fallthru
      _
    // Predicated region
    $region6: #{tpu_custom_call.1} parent=1 // pred_check
      _
    $region7: #{tpu_custom_call.1} parent=1 // pred_check_branch
      %27 = sbr.rel (0) target = $region9
    $region8: #{tpu_custom_call.1} parent=1 // pred_region
      %s29 = ssub.s32 16384, 16384
      %30 = vsyncadd [#allocation6], %s29
      %s31 = sshll.u32 [#allocation5], 4
      %s32 = int_to_ptr.vmem [resolvable:$true] %s31
      %37 = dma.hbm_to_vmem [thread:$0]  %s1, 16384, %s32, [#allocation6], 128, 128, 8
    $region9: #{tpu_custom_call.1} parent=1 // pred_fallthru
      _
    // Predicated region
    $region10: #{tpu_custom_call.1} parent=1 // pred_check
      _
    $region11: #{tpu_custom_call.1} parent=1 // pred_check_branch
      %39 = sbr.rel (0) target = $region13
    $region12: #{tpu_custom_call.1} parent=1 // pred_region
      _
    $region13: #{tpu_custom_call.1} parent=1 // pred_fallthru
      _
    // Predicated region
    $region14: #{tpu_custom_call.1} parent=1 // pred_check
      _
    $region15: #{tpu_custom_call.1} parent=1 // pred_check_branch
      %41 = sbr.rel (0) target = $region17
    $region16: #{tpu_custom_call.1} parent=1 // pred_region
      _
    $region17: #{tpu_custom_call.1} parent=1 // pred_fallthru
      _
    // Predicated region
    $region18: #{tpu_custom_call.1} parent=1 // pred_check
      _
    $region19: #{tpu_custom_call.1} parent=1 // pred_check_branch
      %43 = sbr.rel (0) target = $region21
    $region20: #{tpu_custom_call.1} parent=1 // pred_region
      _
    $region21: #{tpu_custom_call.1} parent=1 // pred_fallthru
      _
    // Predicated region
    $region22: #{tpu_custom_call.1} parent=1 // pred_check
      _
    $region23: #{tpu_custom_call.1} parent=1 // pred_check_branch
      %45 = sbr.rel (0) target = $region25
    $region24: #{tpu_custom_call.1} parent=1 // pred_region
      %46 = dma.done [#allocation4], 1024
    $region25: #{tpu_custom_call.1} parent=1 // pred_fallthru
      _
    // Predicated region
    $region26: #{tpu_custom_call.1} parent=1 // pred_check
      _
    $region27: #{tpu_custom_call.1} parent=1 // pred_check_branch
      %48 = sbr.rel (0) target = $region29
    $region28: #{tpu_custom_call.1} parent=1 // pred_region
      %49 = dma.done [#allocation6], 16384
    $region29: #{tpu_custom_call.1} parent=1 // pred_fallthru
      _
    %v50 = vld [vmem:[#allocation3] sm:$0xff]
    %v51 = vld [vmem:[#allocation3 + $0x8] sm:$0xff]
    %v52 = vld [vmem:[#allocation3 + $0x10] sm:$0xff]
    %v53 = vld [vmem:[#allocation3 + $0x18] sm:$0xff]
    %v54 = vld [vmem:[#allocation3 + $0x20] sm:$0xff]
    %v55 = vld [vmem:[#allocation3 + $0x28] sm:$0xff]
    %v56 = vld [vmem:[#allocation3 + $0x30] sm:$0xff]
    %v57 = vld [vmem:[#allocation3 + $0x38] sm:$0xff]
    %v58 = vld [vmem:[#allocation5] sm:$0xff]
    %v59 = vld [vmem:[#allocation5 + $0x8] sm:$0xff]
    %v60 = vld [vmem:[#allocation5 + $0x10] sm:$0xff]
    %v61 = vld [vmem:[#allocation5 + $0x18] sm:$0xff]
    %v62 = vld [vmem:[#allocation5 + $0x20] sm:$0xff]
    %v63 = vld [vmem:[#allocation5 + $0x28] sm:$0xff]
    %v64 = vld [vmem:[#allocation5 + $0x30] sm:$0xff]
    %v65 = vld [vmem:[#allocation5 + $0x38] sm:$0xff]
    %v66 = vld [vmem:[#allocation5 + $0x40] sm:$0xff]
    %v67 = vld [vmem:[#allocation5 + $0x48] sm:$0xff]
    %v68 = vld [vmem:[#allocation5 + $0x50] sm:$0xff]
    %v69 = vld [vmem:[#allocation5 + $0x58] sm:$0xff]
    %v70 = vld [vmem:[#allocation5 + $0x60] sm:$0xff]
    %v71 = vld [vmem:[#allocation5 + $0x68] sm:$0xff]
    %v72 = vld [vmem:[#allocation5 + $0x70] sm:$0xff]
    %v73 = vld [vmem:[#allocation5 + $0x78] sm:$0xff]
    %v74 = vld [vmem:[#allocation5 + $0x80] sm:$0xff]
    %v75 = vld [vmem:[#allocation5 + $0x88] sm:$0xff]
    %v76 = vld [vmem:[#allocation5 + $0x90] sm:$0xff]
    %v77 = vld [vmem:[#allocation5 + $0x98] sm:$0xff]
    %v78 = vld [vmem:[#allocation5 + $0xa0] sm:$0xff]
    %v79 = vld [vmem:[#allocation5 + $0xa8] sm:$0xff]
    %v80 = vld [vmem:[#allocation5 + $0xb0] sm:$0xff]
    %v81 = vld [vmem:[#allocation5 + $0xb8] sm:$0xff]
    %v82 = vld [vmem:[#allocation5 + $0xc0] sm:$0xff]
    %v83 = vld [vmem:[#allocation5 + $0xc8] sm:$0xff]
    %v84 = vld [vmem:[#allocation5 + $0xd0] sm:$0xff]
    %v85 = vld [vmem:[#allocation5 + $0xd8] sm:$0xff]
    %v86 = vld [vmem:[#allocation5 + $0xe0] sm:$0xff]
    %v87 = vld [vmem:[#allocation5 + $0xe8] sm:$0xff]
    %v88 = vld [vmem:[#allocation5 + $0xf0] sm:$0xff]
    %v89 = vld [vmem:[#allocation5 + $0xf8] sm:$0xff]
    %v90 = vld [vmem:[#allocation5 + $0x100] sm:$0xff]
    %v91 = vld [vmem:[#allocation5 + $0x108] sm:$0xff]
    %v92 = vld [vmem:[#allocation5 + $0x110] sm:$0xff]
    %v93 = vld [vmem:[#allocation5 + $0x118] sm:$0xff]
    %v94 = vld [vmem:[#allocation5 + $0x120] sm:$0xff]
    %v95 = vld [vmem:[#allocation5 + $0x128] sm:$0xff]
    %v96 = vld [vmem:[#allocation5 + $0x130] sm:$0xff]
    %v97 = vld [vmem:[#allocation5 + $0x138] sm:$0xff]
    %v98 = vld [vmem:[#allocation5 + $0x140] sm:$0xff]
    %v99 = vld [vmem:[#allocation5 + $0x148] sm:$0xff]
    %v100 = vld [vmem:[#allocation5 + $0x150] sm:$0xff]
    %v101 = vld [vmem:[#allocation5 + $0x158] sm:$0xff]
    %v102 = vld [vmem:[#allocation5 + $0x160] sm:$0xff]
    %v103 = vld [vmem:[#allocation5 + $0x168] sm:$0xff]
    %v104 = vld [vmem:[#allocation5 + $0x170] sm:$0xff]
    %v105 = vld [vmem:[#allocation5 + $0x178] sm:$0xff]
    %v106 = vld [vmem:[#allocation5 + $0x180] sm:$0xff]
    %v107 = vld [vmem:[#allocation5 + $0x188] sm:$0xff]
    %v108 = vld [vmem:[#allocation5 + $0x190] sm:$0xff]
    %v109 = vld [vmem:[#allocation5 + $0x198] sm:$0xff]
    %v110 = vld [vmem:[#allocation5 + $0x1a0] sm:$0xff]
    %v111 = vld [vmem:[#allocation5 + $0x1a8] sm:$0xff]
    %v112 = vld [vmem:[#allocation5 + $0x1b0] sm:$0xff]
    %v113 = vld [vmem:[#allocation5 + $0x1b8] sm:$0xff]
    %v114 = vld [vmem:[#allocation5 + $0x1c0] sm:$0xff]
    %v115 = vld [vmem:[#allocation5 + $0x1c8] sm:$0xff]
    %v116 = vld [vmem:[#allocation5 + $0x1d0] sm:$0xff]
    %v117 = vld [vmem:[#allocation5 + $0x1d8] sm:$0xff]
    %v118 = vld [vmem:[#allocation5 + $0x1e0] sm:$0xff]
    %v119 = vld [vmem:[#allocation5 + $0x1e8] sm:$0xff]
    %v120 = vld [vmem:[#allocation5 + $0x1f0] sm:$0xff]
    %v121 = vld [vmem:[#allocation5 + $0x1f8] sm:$0xff]
    %v122 = vld [vmem:[#allocation5 + $0x200] sm:$0xff]
    %v123 = vld [vmem:[#allocation5 + $0x208] sm:$0xff]
    %v124 = vld [vmem:[#allocation5 + $0x210] sm:$0xff]
    %v125 = vld [vmem:[#allocation5 + $0x218] sm:$0xff]
    %v126 = vld [vmem:[#allocation5 + $0x220] sm:$0xff]
    %v127 = vld [vmem:[#allocation5 + $0x228] sm:$0xff]
    %v128 = vld [vmem:[#allocation5 + $0x230] sm:$0xff]
    %v129 = vld [vmem:[#allocation5 + $0x238] sm:$0xff]
    %v130 = vld [vmem:[#allocation5 + $0x240] sm:$0xff]
    %v131 = vld [vmem:[#allocation5 + $0x248] sm:$0xff]
    %v132 = vld [vmem:[#allocation5 + $0x250] sm:$0xff]
    %v133 = vld [vmem:[#allocation5 + $0x258] sm:$0xff]
    %v134 = vld [vmem:[#allocation5 + $0x260] sm:$0xff]
    %v135 = vld [vmem:[#allocation5 + $0x268] sm:$0xff]
    %v136 = vld [vmem:[#allocation5 + $0x270] sm:$0xff]
    %v137 = vld [vmem:[#allocation5 + $0x278] sm:$0xff]
    %v138 = vld [vmem:[#allocation5 + $0x280] sm:$0xff]
    %v139 = vld [vmem:[#allocation5 + $0x288] sm:$0xff]
    %v140 = vld [vmem:[#allocation5 + $0x290] sm:$0xff]
    %v141 = vld [vmem:[#allocation5 + $0x298] sm:$0xff]
    %v142 = vld [vmem:[#allocation5 + $0x2a0] sm:$0xff]
    %v143 = vld [vmem:[#allocation5 + $0x2a8] sm:$0xff]
    %v144 = vld [vmem:[#allocation5 + $0x2b0] sm:$0xff]
    %v145 = vld [vmem:[#allocation5 + $0x2b8] sm:$0xff]
    %v146 = vld [vmem:[#allocation5 + $0x2c0] sm:$0xff]
    %v147 = vld [vmem:[#allocation5 + $0x2c8] sm:$0xff]
    %v148 = vld [vmem:[#allocation5 + $0x2d0] sm:$0xff]
    %v149 = vld [vmem:[#allocation5 + $0x2d8] sm:$0xff]
    %v150 = vld [vmem:[#allocation5 + $0x2e0] sm:$0xff]
    %v151 = vld [vmem:[#allocation5 + $0x2e8] sm:$0xff]
    %v152 = vld [vmem:[#allocation5 + $0x2f0] sm:$0xff]
    %v153 = vld [vmem:[#allocation5 + $0x2f8] sm:$0xff]
    %v154 = vld [vmem:[#allocation5 + $0x300] sm:$0xff]
    %v155 = vld [vmem:[#allocation5 + $0x308] sm:$0xff]
    %v156 = vld [vmem:[#allocation5 + $0x310] sm:$0xff]
    %v157 = vld [vmem:[#allocation5 + $0x318] sm:$0xff]
    %v158 = vld [vmem:[#allocation5 + $0x320] sm:$0xff]
    %v159 = vld [vmem:[#allocation5 + $0x328] sm:$0xff]
    %v160 = vld [vmem:[#allocation5 + $0x330] sm:$0xff]
    %v161 = vld [vmem:[#allocation5 + $0x338] sm:$0xff]
    %v162 = vld [vmem:[#allocation5 + $0x340] sm:$0xff]
    %v163 = vld [vmem:[#allocation5 + $0x348] sm:$0xff]
    %v164 = vld [vmem:[#allocation5 + $0x350] sm:$0xff]
    %v165 = vld [vmem:[#allocation5 + $0x358] sm:$0xff]
    %v166 = vld [vmem:[#allocation5 + $0x360] sm:$0xff]
    %v167 = vld [vmem:[#allocation5 + $0x368] sm:$0xff]
    %v168 = vld [vmem:[#allocation5 + $0x370] sm:$0xff]
    %v169 = vld [vmem:[#allocation5 + $0x378] sm:$0xff]
    %v170 = vld [vmem:[#allocation5 + $0x380] sm:$0xff]
    %v171 = vld [vmem:[#allocation5 + $0x388] sm:$0xff]
    %v172 = vld [vmem:[#allocation5 + $0x390] sm:$0xff]
    %v173 = vld [vmem:[#allocation5 + $0x398] sm:$0xff]
    %v174 = vld [vmem:[#allocation5 + $0x3a0] sm:$0xff]
    %v175 = vld [vmem:[#allocation5 + $0x3a8] sm:$0xff]
    %v176 = vld [vmem:[#allocation5 + $0x3b0] sm:$0xff]
    %v177 = vld [vmem:[#allocation5 + $0x3b8] sm:$0xff]
    %v178 = vld [vmem:[#allocation5 + $0x3c0] sm:$0xff]
    %v179 = vld [vmem:[#allocation5 + $0x3c8] sm:$0xff]
    %v180 = vld [vmem:[#allocation5 + $0x3d0] sm:$0xff]
    %v181 = vld [vmem:[#allocation5 + $0x3d8] sm:$0xff]
    %v182 = vld [vmem:[#allocation5 + $0x3e0] sm:$0xff]
    %v183 = vld [vmem:[#allocation5 + $0x3e8] sm:$0xff]
    %v184 = vld [vmem:[#allocation5 + $0x3f0] sm:$0xff]
    %v185 = vld [vmem:[#allocation5 + $0x3f8] sm:$0xff]
    %v186 = vld [vmem:[%s2] sm:$0x3]
    %v188 = vlaneseq
    %v189 = vshrl.u32 %v188, 7
    %v190 = vsub.s32 0, %v189
    %v191 = vrot.slane %v186, %v190
    %v192 = vlaneseq
    %v193 = vshrl.u32 %v192, 7
    %v194 = vsub.s32 1, %v193
    %v195 = vrot.slane %v186, %v194
    %v206 = vunpack.c.l.b16 %v50
    %v207 = vunpack.c.h.b16 %v50
    %v208 = vunpack.c.l.b16 %v51
    %v209 = vunpack.c.h.b16 %v51
    %v210 = vunpack.c.l.b16 %v52
    %v211 = vunpack.c.h.b16 %v52
    %v212 = vunpack.c.l.b16 %v53
    %v213 = vunpack.c.h.b16 %v53
    %v214 = vunpack.c.l.b16 %v54
    %v215 = vunpack.c.h.b16 %v54
    %v216 = vunpack.c.l.b16 %v55
    %v217 = vunpack.c.h.b16 %v55
    %v218 = vunpack.c.l.b16 %v56
    %v219 = vunpack.c.h.b16 %v56
    %v220 = vunpack.c.l.b16 %v57
    %v221 = vunpack.c.h.b16 %v57
    %v222 = vpack.c.b16 %v214, %v206
    %v223 = vpack.c.b16 %v215, %v207
    %v224 = vpack.c.b16 %v216, %v208
    %v225 = vpack.c.b16 %v217, %v209
    %v226 = vpack.c.b16 %v218, %v210
    %v227 = vpack.c.b16 %v219, %v211
    %v228 = vpack.c.b16 %v220, %v212
    %v229 = vpack.c.b16 %v221, %v213
    %v366 = vunpack.c.l.b16 %v58
    %v367 = vunpack.c.h.b16 %v58
    %v368 = vunpack.c.l.b16 %v59
    %v369 = vunpack.c.h.b16 %v59
    %v370 = vunpack.c.l.b16 %v60
    %v371 = vunpack.c.h.b16 %v60
    %v372 = vunpack.c.l.b16 %v61
    %v373 = vunpack.c.h.b16 %v61
    %v374 = vunpack.c.l.b16 %v62
    %v375 = vunpack.c.h.b16 %v62
    %v376 = vunpack.c.l.b16 %v63
    %v377 = vunpack.c.h.b16 %v63
    %v378 = vunpack.c.l.b16 %v64
    %v379 = vunpack.c.h.b16 %v64
    %v380 = vunpack.c.l.b16 %v65
    %v381 = vunpack.c.h.b16 %v65
    %v382 = vunpack.c.l.b16 %v66
    %v383 = vunpack.c.h.b16 %v66
    %v384 = vunpack.c.l.b16 %v67
    %v385 = vunpack.c.h.b16 %v67
    %v386 = vunpack.c.l.b16 %v68
    %v387 = vunpack.c.h.b16 %v68
    %v388 = vunpack.c.l.b16 %v69
    %v389 = vunpack.c.h.b16 %v69
    %v390 = vunpack.c.l.b16 %v70
    %v391 = vunpack.c.h.b16 %v70
    %v392 = vunpack.c.l.b16 %v71
    %v393 = vunpack.c.h.b16 %v71
    %v394 = vunpack.c.l.b16 %v72
    %v395 = vunpack.c.h.b16 %v72
    %v396 = vunpack.c.l.b16 %v73
    %v397 = vunpack.c.h.b16 %v73
    %v398 = vunpack.c.l.b16 %v74
    %v399 = vunpack.c.h.b16 %v74
    %v400 = vunpack.c.l.b16 %v75
    %v401 = vunpack.c.h.b16 %v75
    %v402 = vunpack.c.l.b16 %v76
    %v403 = vunpack.c.h.b16 %v76
    %v404 = vunpack.c.l.b16 %v77
    %v405 = vunpack.c.h.b16 %v77
    %v406 = vunpack.c.l.b16 %v78
    %v407 = vunpack.c.h.b16 %v78
    %v408 = vunpack.c.l.b16 %v79
    %v409 = vunpack.c.h.b16 %v79
    %v410 = vunpack.c.l.b16 %v80
    %v411 = vunpack.c.h.b16 %v80
    %v412 = vunpack.c.l.b16 %v81
    %v413 = vunpack.c.h.b16 %v81
    %v414 = vunpack.c.l.b16 %v82
    %v415 = vunpack.c.h.b16 %v82
    %v416 = vunpack.c.l.b16 %v83
    %v417 = vunpack.c.h.b16 %v83
    %v418 = vunpack.c.l.b16 %v84
    %v419 = vunpack.c.h.b16 %v84
    %v420 = vunpack.c.l.b16 %v85
    %v421 = vunpack.c.h.b16 %v85
    %v422 = vunpack.c.l.b16 %v86
    %v423 = vunpack.c.h.b16 %v86
    %v424 = vunpack.c.l.b16 %v87
    %v425 = vunpack.c.h.b16 %v87
    %v426 = vunpack.c.l.b16 %v88
    %v427 = vunpack.c.h.b16 %v88
    %v428 = vunpack.c.l.b16 %v89
    %v429 = vunpack.c.h.b16 %v89
    %v430 = vunpack.c.l.b16 %v90
    %v431 = vunpack.c.h.b16 %v90
    %v432 = vunpack.c.l.b16 %v91
    %v433 = vunpack.c.h.b16 %v91
    %v434 = vunpack.c.l.b16 %v92
    %v435 = vunpack.c.h.b16 %v92
    %v436 = vunpack.c.l.b16 %v93
    %v437 = vunpack.c.h.b16 %v93
    %v438 = vunpack.c.l.b16 %v94
    %v439 = vunpack.c.h.b16 %v94
    %v440 = vunpack.c.l.b16 %v95
    %v441 = vunpack.c.h.b16 %v95
    %v442 = vunpack.c.l.b16 %v96
    %v443 = vunpack.c.h.b16 %v96
    %v444 = vunpack.c.l.b16 %v97
    %v445 = vunpack.c.h.b16 %v97
    %v446 = vunpack.c.l.b16 %v98
    %v447 = vunpack.c.h.b16 %v98
    %v448 = vunpack.c.l.b16 %v99
    %v449 = vunpack.c.h.b16 %v99
    %v450 = vunpack.c.l.b16 %v100
    %v451 = vunpack.c.h.b16 %v100
    %v452 = vunpack.c.l.b16 %v101
    %v453 = vunpack.c.h.b16 %v101
    %v454 = vunpack.c.l.b16 %v102
    %v455 = vunpack.c.h.b16 %v102
    %v456 = vunpack.c.l.b16 %v103
    %v457 = vunpack.c.h.b16 %v103
    %v458 = vunpack.c.l.b16 %v104
    %v459 = vunpack.c.h.b16 %v104
    %v460 = vunpack.c.l.b16 %v105
    %v461 = vunpack.c.h.b16 %v105
    %v462 = vunpack.c.l.b16 %v106
    %v463 = vunpack.c.h.b16 %v106
    %v464 = vunpack.c.l.b16 %v107
    %v465 = vunpack.c.h.b16 %v107
    %v466 = vunpack.c.l.b16 %v108
    %v467 = vunpack.c.h.b16 %v108
    %v468 = vunpack.c.l.b16 %v109
    %v469 = vunpack.c.h.b16 %v109
    %v470 = vunpack.c.l.b16 %v110
    %v471 = vunpack.c.h.b16 %v110
    %v472 = vunpack.c.l.b16 %v111
    %v473 = vunpack.c.h.b16 %v111
    %v474 = vunpack.c.l.b16 %v112
    %v475 = vunpack.c.h.b16 %v112
    %v476 = vunpack.c.l.b16 %v113
    %v477 = vunpack.c.h.b16 %v113
    %v478 = vunpack.c.l.b16 %v114
    %v479 = vunpack.c.h.b16 %v114
    %v480 = vunpack.c.l.b16 %v115
    %v481 = vunpack.c.h.b16 %v115
    %v482 = vunpack.c.l.b16 %v116
    %v483 = vunpack.c.h.b16 %v116
    %v484 = vunpack.c.l.b16 %v117
    %v485 = vunpack.c.h.b16 %v117
    %v486 = vunpack.c.l.b16 %v118
    %v487 = vunpack.c.h.b16 %v118
    %v488 = vunpack.c.l.b16 %v119
    %v489 = vunpack.c.h.b16 %v119
    %v490 = vunpack.c.l.b16 %v120
    %v491 = vunpack.c.h.b16 %v120
    %v492 = vunpack.c.l.b16 %v121
    %v493 = vunpack.c.h.b16 %v121
    %v494 = vunpack.c.l.b16 %v122
    %v495 = vunpack.c.h.b16 %v122
    %v496 = vunpack.c.l.b16 %v123
    %v497 = vunpack.c.h.b16 %v123
    %v498 = vunpack.c.l.b16 %v124
    %v499 = vunpack.c.h.b16 %v124
    %v500 = vunpack.c.l.b16 %v125
    %v501 = vunpack.c.h.b16 %v125
    %v502 = vunpack.c.l.b16 %v126
    %v503 = vunpack.c.h.b16 %v126
    %v504 = vunpack.c.l.b16 %v127
    %v505 = vunpack.c.h.b16 %v127
    %v506 = vunpack.c.l.b16 %v128
    %v507 = vunpack.c.h.b16 %v128
    %v508 = vunpack.c.l.b16 %v129
    %v509 = vunpack.c.h.b16 %v129
    %v510 = vunpack.c.l.b16 %v130
    %v511 = vunpack.c.h.b16 %v130
    %v512 = vunpack.c.l.b16 %v131
    %v513 = vunpack.c.h.b16 %v131
    %v514 = vunpack.c.l.b16 %v132
    %v515 = vunpack.c.h.b16 %v132
    %v516 = vunpack.c.l.b16 %v133
    %v517 = vunpack.c.h.b16 %v133
    %v518 = vunpack.c.l.b16 %v134
    %v519 = vunpack.c.h.b16 %v134
    %v520 = vunpack.c.l.b16 %v135
    %v521 = vunpack.c.h.b16 %v135
    %v522 = vunpack.c.l.b16 %v136
    %v523 = vunpack.c.h.b16 %v136
    %v524 = vunpack.c.l.b16 %v137
    %v525 = vunpack.c.h.b16 %v137
    %v526 = vunpack.c.l.b16 %v138
    %v527 = vunpack.c.h.b16 %v138
    %v528 = vunpack.c.l.b16 %v139
    %v529 = vunpack.c.h.b16 %v139
    %v530 = vunpack.c.l.b16 %v140
    %v531 = vunpack.c.h.b16 %v140
    %v532 = vunpack.c.l.b16 %v141
    %v533 = vunpack.c.h.b16 %v141
    %v534 = vunpack.c.l.b16 %v142
    %v535 = vunpack.c.h.b16 %v142
    %v536 = vunpack.c.l.b16 %v143
    %v537 = vunpack.c.h.b16 %v143
    %v538 = vunpack.c.l.b16 %v144
    %v539 = vunpack.c.h.b16 %v144
    %v540 = vunpack.c.l.b16 %v145
    %v541 = vunpack.c.h.b16 %v145
    %v542 = vunpack.c.l.b16 %v146
    %v543 = vunpack.c.h.b16 %v146
    %v544 = vunpack.c.l.b16 %v147
    %v545 = vunpack.c.h.b16 %v147
    %v546 = vunpack.c.l.b16 %v148
    %v547 = vunpack.c.h.b16 %v148
    %v548 = vunpack.c.l.b16 %v149
    %v549 = vunpack.c.h.b16 %v149
    %v550 = vunpack.c.l.b16 %v150
    %v551 = vunpack.c.h.b16 %v150
    %v552 = vunpack.c.l.b16 %v151
    %v553 = vunpack.c.h.b16 %v151
    %v554 = vunpack.c.l.b16 %v152
    %v555 = vunpack.c.h.b16 %v152
    %v556 = vunpack.c.l.b16 %v153
    %v557 = vunpack.c.h.b16 %v153
    %v558 = vunpack.c.l.b16 %v154
    %v559 = vunpack.c.h.b16 %v154
    %v560 = vunpack.c.l.b16 %v155
    %v561 = vunpack.c.h.b16 %v155
    %v562 = vunpack.c.l.b16 %v156
    %v563 = vunpack.c.h.b16 %v156
    %v564 = vunpack.c.l.b16 %v157
    %v565 = vunpack.c.h.b16 %v157
    %v566 = vunpack.c.l.b16 %v158
    %v567 = vunpack.c.h.b16 %v158
    %v568 = vunpack.c.l.b16 %v159
    %v569 = vunpack.c.h.b16 %v159
    %v570 = vunpack.c.l.b16 %v160
    %v571 = vunpack.c.h.b16 %v160
    %v572 = vunpack.c.l.b16 %v161
    %v573 = vunpack.c.h.b16 %v161
    %v574 = vunpack.c.l.b16 %v162
    %v575 = vunpack.c.h.b16 %v162
    %v576 = vunpack.c.l.b16 %v163
    %v577 = vunpack.c.h.b16 %v163
    %v578 = vunpack.c.l.b16 %v164
    %v579 = vunpack.c.h.b16 %v164
    %v580 = vunpack.c.l.b16 %v165
    %v581 = vunpack.c.h.b16 %v165
    %v582 = vunpack.c.l.b16 %v166
    %v583 = vunpack.c.h.b16 %v166
    %v584 = vunpack.c.l.b16 %v167
    %v585 = vunpack.c.h.b16 %v167
    %v586 = vunpack.c.l.b16 %v168
    %v587 = vunpack.c.h.b16 %v168
    %v588 = vunpack.c.l.b16 %v169
    %v589 = vunpack.c.h.b16 %v169
    %v590 = vunpack.c.l.b16 %v170
    %v591 = vunpack.c.h.b16 %v170
    %v592 = vunpack.c.l.b16 %v171
    %v593 = vunpack.c.h.b16 %v171
    %v594 = vunpack.c.l.b16 %v172
    %v595 = vunpack.c.h.b16 %v172
    %v596 = vunpack.c.l.b16 %v173
    %v597 = vunpack.c.h.b16 %v173
    %v598 = vunpack.c.l.b16 %v174
    %v599 = vunpack.c.h.b16 %v174
    %v600 = vunpack.c.l.b16 %v175
    %v601 = vunpack.c.h.b16 %v175
    %v602 = vunpack.c.l.b16 %v176
    %v603 = vunpack.c.h.b16 %v176
    %v604 = vunpack.c.l.b16 %v177
    %v605 = vunpack.c.h.b16 %v177
    %v606 = vunpack.c.l.b16 %v178
    %v607 = vunpack.c.h.b16 %v178
    %v608 = vunpack.c.l.b16 %v179
    %v609 = vunpack.c.h.b16 %v179
    %v610 = vunpack.c.l.b16 %v180
    %v611 = vunpack.c.h.b16 %v180
    %v612 = vunpack.c.l.b16 %v181
    %v613 = vunpack.c.h.b16 %v181
    %v614 = vunpack.c.l.b16 %v182
    %v615 = vunpack.c.h.b16 %v182
    %v616 = vunpack.c.l.b16 %v183
    %v617 = vunpack.c.h.b16 %v183
    %v618 = vunpack.c.l.b16 %v184
    %v619 = vunpack.c.h.b16 %v184
    %v620 = vunpack.c.l.b16 %v185
    %v621 = vunpack.c.h.b16 %v185
    %v622 = vpack.c.b16 %v368, %v366
    %v623 = vpack.c.b16 %v369, %v367
    %v624 = vpack.c.b16 %v372, %v370
    %v625 = vpack.c.b16 %v373, %v371
    %v626 = vpack.c.b16 %v376, %v374
    %v627 = vpack.c.b16 %v377, %v375
    %v628 = vpack.c.b16 %v380, %v378
    %v629 = vpack.c.b16 %v381, %v379
    %v630 = vpack.c.b16 %v384, %v382
    %v631 = vpack.c.b16 %v385, %v383
    %v632 = vpack.c.b16 %v388, %v386
    %v633 = vpack.c.b16 %v389, %v387
    %v634 = vpack.c.b16 %v392, %v390
    %v635 = vpack.c.b16 %v393, %v391
    %v636 = vpack.c.b16 %v396, %v394
    %v637 = vpack.c.b16 %v397, %v395
    %v638 = vpack.c.b16 %v400, %v398
    %v639 = vpack.c.b16 %v401, %v399
    %v640 = vpack.c.b16 %v404, %v402
    %v641 = vpack.c.b16 %v405, %v403
    %v642 = vpack.c.b16 %v408, %v406
    %v643 = vpack.c.b16 %v409, %v407
    %v644 = vpack.c.b16 %v412, %v410
    %v645 = vpack.c.b16 %v413, %v411
    %v646 = vpack.c.b16 %v416, %v414
    %v647 = vpack.c.b16 %v417, %v415
    %v648 = vpack.c.b16 %v420, %v418
    %v649 = vpack.c.b16 %v421, %v419
    %v650 = vpack.c.b16 %v424, %v422
    %v651 = vpack.c.b16 %v425, %v423
    %v652 = vpack.c.b16 %v428, %v426
    %v653 = vpack.c.b16 %v429, %v427
    %v654 = vpack.c.b16 %v432, %v430
    %v655 = vpack.c.b16 %v433, %v431
    %v656 = vpack.c.b16 %v436, %v434
    %v657 = vpack.c.b16 %v437, %v435
    %v658 = vpack.c.b16 %v440, %v438
    %v659 = vpack.c.b16 %v441, %v439
    %v660 = vpack.c.b16 %v444, %v442
    %v661 = vpack.c.b16 %v445, %v443
    %v662 = vpack.c.b16 %v448, %v446
    %v663 = vpack.c.b16 %v449, %v447
    %v664 = vpack.c.b16 %v452, %v450
    %v665 = vpack.c.b16 %v453, %v451
    %v666 = vpack.c.b16 %v456, %v454
    %v667 = vpack.c.b16 %v457, %v455
    %v668 = vpack.c.b16 %v460, %v458
    %v669 = vpack.c.b16 %v461, %v459
    %v670 = vpack.c.b16 %v464, %v462
    %v671 = vpack.c.b16 %v465, %v463
    %v672 = vpack.c.b16 %v468, %v466
    %v673 = vpack.c.b16 %v469, %v467
    %v674 = vpack.c.b16 %v472, %v470
    %v675 = vpack.c.b16 %v473, %v471
    %v676 = vpack.c.b16 %v476, %v474
    %v677 = vpack.c.b16 %v477, %v475
    %v678 = vpack.c.b16 %v480, %v478
    %v679 = vpack.c.b16 %v481, %v479
    %v680 = vpack.c.b16 %v484, %v482
    %v681 = vpack.c.b16 %v485, %v483
    %v682 = vpack.c.b16 %v488, %v486
    %v683 = vpack.c.b16 %v489, %v487
    %v684 = vpack.c.b16 %v492, %v490
    %v685 = vpack.c.b16 %v493, %v491
    %v686 = vpack.c.b16 %v496, %v494
    %v687 = vpack.c.b16 %v497, %v495
    %v688 = vpack.c.b16 %v500, %v498
    %v689 = vpack.c.b16 %v501, %v499
    %v690 = vpack.c.b16 %v504, %v502
    %v691 = vpack.c.b16 %v505, %v503
    %v692 = vpack.c.b16 %v508, %v506
    %v693 = vpack.c.b16 %v509, %v507
    %v694 = vpack.c.b16 %v512, %v510
    %v695 = vpack.c.b16 %v513, %v511
    %v696 = vpack.c.b16 %v516, %v514
    %v697 = vpack.c.b16 %v517, %v515
    %v698 = vpack.c.b16 %v520, %v518
    %v699 = vpack.c.b16 %v521, %v519
    %v700 = vpack.c.b16 %v524, %v522
    %v701 = vpack.c.b16 %v525, %v523
    %v702 = vpack.c.b16 %v528, %v526
    %v703 = vpack.c.b16 %v529, %v527
    %v704 = vpack.c.b16 %v532, %v530
    %v705 = vpack.c.b16 %v533, %v531
    %v706 = vpack.c.b16 %v536, %v534
    %v707 = vpack.c.b16 %v537, %v535
    %v708 = vpack.c.b16 %v540, %v538
    %v709 = vpack.c.b16 %v541, %v539
    %v710 = vpack.c.b16 %v544, %v542
    %v711 = vpack.c.b16 %v545, %v543
    %v712 = vpack.c.b16 %v548, %v546
    %v713 = vpack.c.b16 %v549, %v547
    %v714 = vpack.c.b16 %v552, %v550
    %v715 = vpack.c.b16 %v553, %v551
    %v716 = vpack.c.b16 %v556, %v554
    %v717 = vpack.c.b16 %v557, %v555
    %v718 = vpack.c.b16 %v560, %v558
    %v719 = vpack.c.b16 %v561, %v559
    %v720 = vpack.c.b16 %v564, %v562
    %v721 = vpack.c.b16 %v565, %v563
    %v722 = vpack.c.b16 %v568, %v566
    %v723 = vpack.c.b16 %v569, %v567
    %v724 = vpack.c.b16 %v572, %v570
    %v725 = vpack.c.b16 %v573, %v571
    %v726 = vpack.c.b16 %v576, %v574
    %v727 = vpack.c.b16 %v577, %v575
    %v728 = vpack.c.b16 %v580, %v578
    %v729 = vpack.c.b16 %v581, %v579
    %v730 = vpack.c.b16 %v584, %v582
    %v731 = vpack.c.b16 %v585, %v583
    %v732 = vpack.c.b16 %v588, %v586
    %v733 = vpack.c.b16 %v589, %v587
    %v734 = vpack.c.b16 %v592, %v590
    %v735 = vpack.c.b16 %v593, %v591
    %v736 = vpack.c.b16 %v596, %v594
    %v737 = vpack.c.b16 %v597, %v595
    %v738 = vpack.c.b16 %v600, %v598
    %v739 = vpack.c.b16 %v601, %v599
    %v740 = vpack.c.b16 %v604, %v602
    %v741 = vpack.c.b16 %v605, %v603
    %v742 = vpack.c.b16 %v608, %v606
    %v743 = vpack.c.b16 %v609, %v607
    %v744 = vpack.c.b16 %v612, %v610
    %v745 = vpack.c.b16 %v613, %v611
    %v746 = vpack.c.b16 %v616, %v614
    %v747 = vpack.c.b16 %v617, %v615
    %v748 = vpack.c.b16 %v620, %v618
    %v749 = vpack.c.b16 %v621, %v619
    %878 = vmatprep.subr.bf16.mxu0 %v623
    %879 = vmatpush1.bf16.msra.mxu0 %v622
    %880 = vmatprep.subr.bf16.mxu0 %v625
    %881 = vmatpush1.bf16.msra.mxu0 %v624
    %882 = vmatprep.subr.bf16.mxu0 %v627
    %883 = vmatpush1.bf16.msra.mxu0 %v626
    %884 = vmatprep.subr.bf16.mxu0 %v629
    %885 = vmatpush1.bf16.msra.mxu0 %v628
    %886 = vmatprep.subr.bf16.mxu0 %v631
    %887 = vmatpush1.bf16.msra.mxu0 %v630
    %888 = vmatprep.subr.bf16.mxu0 %v633
    %889 = vmatpush1.bf16.msra.mxu0 %v632
    %890 = vmatprep.subr.bf16.mxu0 %v635
    %891 = vmatpush1.bf16.msra.mxu0 %v634
    %892 = vmatprep.subr.bf16.mxu0 %v637
    %893 = vmatpush1.bf16.msra.mxu0 %v636
    %894 = vmatprep.subr.bf16.mxu0 %v639
    %895 = vmatpush1.bf16.msra.mxu0 %v638
    %896 = vmatprep.subr.bf16.mxu0 %v641
    %897 = vmatpush1.bf16.msra.mxu0 %v640
    %898 = vmatprep.subr.bf16.mxu0 %v643
    %899 = vmatpush1.bf16.msra.mxu0 %v642
    %900 = vmatprep.subr.bf16.mxu0 %v645
    %901 = vmatpush1.bf16.msra.mxu0 %v644
    %902 = vmatprep.subr.bf16.mxu0 %v647
    %903 = vmatpush1.bf16.msra.mxu0 %v646
    %904 = vmatprep.subr.bf16.mxu0 %v649
    %905 = vmatpush1.bf16.msra.mxu0 %v648
    %906 = vmatprep.subr.bf16.mxu0 %v651
    %907 = vmatpush1.bf16.msra.mxu0 %v650
    %908 = vmatprep.subr.bf16.mxu0 %v653
    %909 = vmatpush1.bf16.msra.mxu0 %v652
    %910 = vmatprep.mubr.bf16.mxu0 %v223
    %911 = vmatmul.mubr.bf16.gmra.mrb[0].mxu0 %v222
    %v912 = vpop.f32.mrb[0].mxu0
    %v913 = vadd.f32 %v191, %v912
    %v914 = vpop.f32.mrb[0].mxu0
    %v915 = vadd.f32 %v195, %v914
    %v916 = vpop.f32.mrb[0].mxu0
    %v917 = vadd.f32 %v191, %v916
    %v918 = vpop.f32.mrb[0].mxu0
    %v919 = vadd.f32 %v195, %v918
    %920 = vdwg.mxu0
    %921 = vmatprep.subr.bf16.mxu0 %v655
    %922 = vmatpush1.bf16.msra.mxu0 %v654
    %923 = vmatprep.subr.bf16.mxu0 %v657
    %924 = vmatpush1.bf16.msra.mxu0 %v656
    %925 = vmatprep.subr.bf16.mxu0 %v659
    %926 = vmatpush1.bf16.msra.mxu0 %v658
    %927 = vmatprep.subr.bf16.mxu0 %v661
    %928 = vmatpush1.bf16.msra.mxu0 %v660
    %929 = vmatprep.subr.bf16.mxu0 %v663
    %930 = vmatpush1.bf16.msra.mxu0 %v662
    %931 = vmatprep.subr.bf16.mxu0 %v665
    %932 = vmatpush1.bf16.msra.mxu0 %v664
    %933 = vmatprep.subr.bf16.mxu0 %v667
    %934 = vmatpush1.bf16.msra.mxu0 %v666
    %935 = vmatprep.subr.bf16.mxu0 %v669
    %936 = vmatpush1.bf16.msra.mxu0 %v668
    %937 = vmatprep.subr.bf16.mxu0 %v671
    %938 = vmatpush1.bf16.msra.mxu0 %v670
    %939 = vmatprep.subr.bf16.mxu0 %v673
    %940 = vmatpush1.bf16.msra.mxu0 %v672
    %941 = vmatprep.subr.bf16.mxu0 %v675
    %942 = vmatpush1.bf16.msra.mxu0 %v674
    %943 = vmatprep.subr.bf16.mxu0 %v677
    %944 = vmatpush1.bf16.msra.mxu0 %v676
    %945 = vmatprep.subr.bf16.mxu0 %v679
    %946 = vmatpush1.bf16.msra.mxu0 %v678
    %947 = vmatprep.subr.bf16.mxu0 %v681
    %948 = vmatpush1.bf16.msra.mxu0 %v680
    %949 = vmatprep.subr.bf16.mxu0 %v683
    %950 = vmatpush1.bf16.msra.mxu0 %v682
    %951 = vmatprep.subr.bf16.mxu0 %v685
    %952 = vmatpush1.bf16.msra.mxu0 %v684
    %953 = vmatprep.mubr.bf16.mxu0 %v225
    %954 = vmatmul.mubr.bf16.gmra.mrb[0].mxu0 %v224
    %v955 = vpop.f32.mrb[0].mxu0
    %v956 = vadd.f32 %v913, %v955
    %v957 = vpop.f32.mrb[0].mxu0
    %v958 = vadd.f32 %v915, %v957
    %v959 = vpop.f32.mrb[0].mxu0
    %v960 = vadd.f32 %v917, %v959
    %v961 = vpop.f32.mrb[0].mxu0
    %v962 = vadd.f32 %v919, %v961
    %963 = vdwg.mxu0
    %964 = vmatprep.subr.bf16.mxu0 %v687
    %965 = vmatpush1.bf16.msra.mxu0 %v686
    %966 = vmatprep.subr.bf16.mxu0 %v689
    %967 = vmatpush1.bf16.msra.mxu0 %v688
    %968 = vmatprep.subr.bf16.mxu0 %v691
    %969 = vmatpush1.bf16.msra.mxu0 %v690
    %970 = vmatprep.subr.bf16.mxu0 %v693
    %971 = vmatpush1.bf16.msra.mxu0 %v692
    %972 = vmatprep.subr.bf16.mxu0 %v695
    %973 = vmatpush1.bf16.msra.mxu0 %v694
    %974 = vmatprep.subr.bf16.mxu0 %v697
    %975 = vmatpush1.bf16.msra.mxu0 %v696
    %976 = vmatprep.subr.bf16.mxu0 %v699
    %977 = vmatpush1.bf16.msra.mxu0 %v698
    %978 = vmatprep.subr.bf16.mxu0 %v701
    %979 = vmatpush1.bf16.msra.mxu0 %v700
    %980 = vmatprep.subr.bf16.mxu0 %v703
    %981 = vmatpush1.bf16.msra.mxu0 %v702
    %982 = vmatprep.subr.bf16.mxu0 %v705
    %983 = vmatpush1.bf16.msra.mxu0 %v704
    %984 = vmatprep.subr.bf16.mxu0 %v707
    %985 = vmatpush1.bf16.msra.mxu0 %v706
    %986 = vmatprep.subr.bf16.mxu0 %v709
    %987 = vmatpush1.bf16.msra.mxu0 %v708
    %988 = vmatprep.subr.bf16.mxu0 %v711
    %989 = vmatpush1.bf16.msra.mxu0 %v710
    %990 = vmatprep.subr.bf16.mxu0 %v713
    %991 = vmatpush1.bf16.msra.mxu0 %v712
    %992 = vmatprep.subr.bf16.mxu0 %v715
    %993 = vmatpush1.bf16.msra.mxu0 %v714
    %994 = vmatprep.subr.bf16.mxu0 %v717
    %995 = vmatpush1.bf16.msra.mxu0 %v716
    %996 = vmatprep.mubr.bf16.mxu0 %v227
    %997 = vmatmul.mubr.bf16.gmra.mrb[0].mxu0 %v226
    %v998 = vpop.f32.mrb[0].mxu0
    %v999 = vadd.f32 %v956, %v998
    %v1000 = vpop.f32.mrb[0].mxu0
    %v1001 = vadd.f32 %v958, %v1000
    %v1002 = vpop.f32.mrb[0].mxu0
    %v1003 = vadd.f32 %v960, %v1002
    %v1004 = vpop.f32.mrb[0].mxu0
    %v1005 = vadd.f32 %v962, %v1004
    %1006 = vdwg.mxu0
    %1007 = vmatprep.subr.bf16.mxu0 %v719
    %1008 = vmatpush1.bf16.msra.mxu0 %v718
    %1009 = vmatprep.subr.bf16.mxu0 %v721
    %1010 = vmatpush1.bf16.msra.mxu0 %v720
    %1011 = vmatprep.subr.bf16.mxu0 %v723
    %1012 = vmatpush1.bf16.msra.mxu0 %v722
    %1013 = vmatprep.subr.bf16.mxu0 %v725
    %1014 = vmatpush1.bf16.msra.mxu0 %v724
    %1015 = vmatprep.subr.bf16.mxu0 %v727
    %1016 = vmatpush1.bf16.msra.mxu0 %v726
    %1017 = vmatprep.subr.bf16.mxu0 %v729
    %1018 = vmatpush1.bf16.msra.mxu0 %v728
    %1019 = vmatprep.subr.bf16.mxu0 %v731
    %1020 = vmatpush1.bf16.msra.mxu0 %v730
    %1021 = vmatprep.subr.bf16.mxu0 %v733
    %1022 = vmatpush1.bf16.msra.mxu0 %v732
    %1023 = vmatprep.subr.bf16.mxu0 %v735
    %1024 = vmatpush1.bf16.msra.mxu0 %v734
    %1025 = vmatprep.subr.bf16.mxu0 %v737
    %1026 = vmatpush1.bf16.msra.mxu0 %v736
    %1027 = vmatprep.subr.bf16.mxu0 %v739
    %1028 = vmatpush1.bf16.msra.mxu0 %v738
    %1029 = vmatprep.subr.bf16.mxu0 %v741
    %1030 = vmatpush1.bf16.msra.mxu0 %v740
    %1031 = vmatprep.subr.bf16.mxu0 %v743
    %1032 = vmatpush1.bf16.msra.mxu0 %v742
    %1033 = vmatprep.subr.bf16.mxu0 %v745
    %1034 = vmatpush1.bf16.msra.mxu0 %v744
    %1035 = vmatprep.subr.bf16.mxu0 %v747
    %1036 = vmatpush1.bf16.msra.mxu0 %v746
    %1037 = vmatprep.subr.bf16.mxu0 %v749
    %1038 = vmatpush1.bf16.msra.mxu0 %v748
    %1039 = vmatprep.mubr.bf16.mxu0 %v229
    %1040 = vmatmul.mubr.bf16.gmra.mrb[0].mxu0 %v228
    %v1041 = vpop.f32.mrb[0].mxu0
    %v1042 = vadd.f32 %v999, %v1041
    %v1043 = vpop.f32.mrb[0].mxu0
    %v1044 = vadd.f32 %v1001, %v1043
    %v1045 = vpop.f32.mrb[0].mxu0
    %v1046 = vadd.f32 %v1003, %v1045
    %v1047 = vpop.f32.mrb[0].mxu0
    %v1048 = vadd.f32 %v1005, %v1047
    %1049 = vdwg.mxu0
    %v1050 = vtanh.pop %v1042
    %v1051 = vtanh.pop %v1044
    %v1052 = vtanh.pop %v1046
    %v1053 = vtanh.pop %v1048
    %v1054 = vld [vmem:[%s3] sm:$0x3]
    %v1056 = vlaneseq
    %v1057 = vshrl.u32 %v1056, 7
    %v1058 = vsub.s32 0, %v1057
    %v1059 = vrot.slane %v1054, %v1058
    %v1060 = vlaneseq
    %v1061 = vshrl.u32 %v1060, 7
    %v1062 = vsub.s32 1, %v1061
    %v1063 = vrot.slane %v1054, %v1062
    %v1066 = vmul.f32 %v1050, %v1059
    %v1067 = vmul.f32 %v1051, %v1063
    %v1068 = vmul.f32 %v1052, %v1059
    %v1069 = vmul.f32 %v1053, %v1063
    %v1070 = vadd.f32 %v1066, %v1067
    %1071 = vadd.xlane.f32.xlu0 %v1070
    %v1072 = vpop.xlane.xlu0 %1071
    %v1073 = vadd.f32 %v1068, %v1069
    %1074 = vadd.xlane.f32.xlu0 %v1073
    %v1075 = vpop.xlane.xlu0 %1074
    %v1076 = vld [vmem:[#allocation2] sm:$0x1]
    %v1078 = vlaneseq
    %v1079 = vshrl.u32 %v1078, 7
    %v1080 = vsub.s32 0, %v1079
    %v1081 = vrot.slane %v1076, %v1080
    %v1083 = vadd.f32 %v1072, %v1081
    %v1084 = vadd.f32 %v1075, %v1081
    %vm1085 = vcmask 7168
    %1086 = vst.msk [vmem:[%s5] sm:$0xff] %vm1085, %v1083
    %1087 = vst.msk [vmem:[%s5 + $0x8] sm:$0xff] %vm1085, %v1084
    // Predicated region
    $region30: #{tpu_custom_call.1} parent=1 // pred_check
      _
    $region31: #{tpu_custom_call.1} parent=1 // pred_check_branch
      %1089 = sbr.rel (0) target = $region33
    $region32: #{tpu_custom_call.1} parent=1 // pred_region
      _
    $region33: #{tpu_custom_call.1} parent=1 // pred_fallthru
      _
    // Predicated region
    $region34: #{tpu_custom_call.1} parent=1 // pred_check
      _
    $region35: #{tpu_custom_call.1} parent=1 // pred_check_branch
      %1091 = sbr.rel (0) target = $region37
    $region36: #{tpu_custom_call.1} parent=1 // pred_region
      _
    $region37: #{tpu_custom_call.1} parent=1 // pred_fallthru
      _
    %1092 = vsyncpa [#allocation4], 1
    %1093 = vsyncpa [#allocation6], 1

</llo_original>
